<compile_context>
chip_gen: v5e
topology: v5e:2x2
jax: 0.10.0
libtpu: 0.0.40
codegen_flags: <defaults>
</compile_context>

<pallas_src>
import math
from functools import partial

import numpy as np
import jax
import jax.numpy as jnp
from jax.experimental import pallas as pl
from jax.experimental.pallas import tpu as pltpu

# ---- opt dict mirroring ConvBlock.__init__ ------------------------------------
OPT = dict(
    min_variance=1e-3,
    mnv_init=0.1,            # initial multiplicative-noise variance (alpha)
    prior_precision=1.0,     # only used by the KL term, not in forward
    prior_mean=0.0,          # only used by the KL term, not in forward
    model_kl_div_weight=1.0, # only used by the KL term, not in forward
    bn=True,
    preact=False,
    affine_bn=True,
    bn_eps=1e-5,
    activetype="ReLU",
)
# TODO(synk): KL-divergence regularizer (prior_precision/prior_mean/kl_div_weight)
# belongs to the training loss, not the forward pass, so it is not implemented here.

IN_CH, OUT_CH, KSIZE, STRIDE, PAD = 4, 8, 3, 1, 1

_INV_SQRT_2 = 1.0 / math.sqrt(2.0)
_INV_SQRT_2PI = 1.0 / math.sqrt(2.0 * math.pi)


# ---- Pallas kernel: fused Conv2dMNCL + (folded) BatchNorm2d + ADF-ReLU ---------
def convblock_kernel(pmT_ref, pvT_ref, w_ref, bias_ref, om_ref, ov_ref, *, min_variance):
    """One M-tile. Transposed-GEMM layout: M on the lane axis everywhere, so the
    (C_out, tm) results and both outputs are lane-dense (unmasked vst)."""
    pmT = pmT_ref[...]            # (K, tm)   im2col'ed input mean, transposed
    pvT = pvT_ref[...]            # (K, tm)   im2col'ed input variance, transposed
    w = w_ref[...]                # (3*C_out, K)  packed [Wm ; W2a ; W2b] (BN & alpha folded)
    bias = bias_ref[...]          # (C_out, 1)    beta - running_mean * scale

    wm = w[0:OUT_CH]              # static 8-aligned sublane slices (free)
    w2a = w[OUT_CH:2 * OUT_CH]
    w2b = w[2 * OUT_CH:3 * OUT_CH]

    # Conv2dMNCL moment propagation with BatchNorm folded into the weights:
    #   y_mean = scale*(conv(mu,W) - rmean) + beta       = Wm  @ mu_patches + bias
    #   y_var  = scale^2 * conv(var*(1+a)+a*mu^2, W^2)   = W2a @ var_patches + W2b @ mu^2_patches
    y_mean = jnp.dot(wm, pmT, preferred_element_type=jnp.float32) + bias        # (C_out, tm)
    y_var = (jnp.dot(w2a, pvT, preferred_element_type=jnp.float32)
             + jnp.dot(w2b, pmT * pmT, preferred_element_type=jnp.float32))     # (C_out, tm)

    # varprop.ReLU : moment-matched (ADF) ReLU; rsqrt keeps transcendental work on the
    # EUP slot, std/div recovered with two VPU muls instead of sqrt + full divide.
    inv_std = jax.lax.rsqrt(y_var)
    std = y_var * inv_std
    div = y_mean * inv_std
    pdf = _INV_SQRT_2PI * jnp.exp(-0.5 * div * div)
    cdf = 0.5 * (1.0 + jax.lax.erf(div * _INV_SQRT_2))
    out_mean = y_mean * cdf + std * pdf
    out_var = (y_mean * y_mean + y_var) * cdf + y_mean * std * pdf - out_mean * out_mean

    om_ref[...] = out_mean
    ov_ref[...] = jnp.maximum(out_var, min_variance)    # keep_variance clamp (output only)


# ---- wrapper -------------------------------------------------------------------
def _pick_tm(M, tm_max=1024):
    """M-tile on the lane axis: multiple of 128, as large as possible, but keep at
    least two grid steps when M allows so both v7x TensorCores get work."""
    if M <= 128:
        return 128
    half = -(-M // 2)                 # ceil(M / 2)
    half = -(-half // 128) * 128      # round up to a lane multiple
    return max(128, min(tm_max, half))


def conv_block_forward(x_mean, x_var, params, *, tm_max=1024):
    """x_mean, x_var: (N, C_in, H, W) float32 (NCHW). Returns (mean, var) NCHW."""
    N, C, H, W = x_mean.shape
    k = KSIZE
    Ho = (H + 2 * PAD - k) // STRIDE + 1
    Wo = (W + 2 * PAD - k) // STRIDE + 1
    K = k * k * C
    M = N * Ho * Wo

    # Layout plumbing (XLA glue): NCHW -> transposed im2col (K, M),
    # K index = (di*k + dj)*C + c, M index = (n*Ho + i)*Wo + j.
    # TODO(synk): at large shapes, pull patch extraction into the kernel (halo DMA +
    # shifted in-VMEM views) to avoid the ~k*k HBM expansion of both moment tensors.
    def im2col_T(x_nchw):
        xp = jnp.pad(x_nchw, ((0, 0), (0, 0), (PAD, PAD), (PAD, PAD)))
        rows = []
        for di in range(k):
            for dj in range(k):
                win = xp[:, :, di:di + STRIDE * Ho:STRIDE, dj:dj + STRIDE * Wo:STRIDE]
                rows.append(jnp.transpose(win, (1, 0, 2, 3)).reshape(C, M))
        return jnp.concatenate(rows, axis=0)                      # (K, M)

    pmT = im2col_T(x_mean)
    pvT = im2col_T(x_var)

    tm = _pick_tm(M, tm_max)
    Mp = pl.cdiv(M, tm) * tm
    if Mp != M:
        pmT = jnp.pad(pmT, ((0, 0), (0, Mp - M)))
        # pad variance columns with 1.0 so padded lanes never hit rsqrt(0)
        pvT = jnp.pad(pvT, ((0, 0), (0, Mp - M)), constant_values=1.0)

    # Fold BatchNorm (running stats, affine) and the multiplicative-noise alpha into
    # the conv weights (wrapper-side constant folding; weights only, not inputs).
    scale = params["gamma"] * jax.lax.rsqrt(params["running_var"] + OPT["bn_eps"])  # (C_out,)
    bias_m = params["beta"] - params["running_mean"] * scale                        # (C_out,)
    wt = jnp.transpose(params["weight"], (2, 3, 1, 0)).reshape(K, OUT_CH)           # (K, C_out)
    w2 = wt * wt
    alpha_k = jnp.tile(params["alpha"], k * k).reshape(K, 1)                        # per patch row
    wm = (wt * scale[None, :]).T                                                    # (C_out, K)
    w2a = (w2 * (1.0 + alpha_k) * (scale * scale)[None, :]).T                       # (C_out, K)
    w2b = (w2 * alpha_k * (scale * scale)[None, :]).T                               # (C_out, K)
    w_pack = jnp.concatenate([wm, w2a, w2b], axis=0)                                # (3*C_out, K)
    bias_col = bias_m.reshape(OUT_CH, 1)

    kern = partial(convblock_kernel, min_variance=OPT["min_variance"])

    om, ov = pl.pallas_call(
        kern,
        out_shape=(jax.ShapeDtypeStruct((OUT_CH, Mp), jnp.float32),
                   jax.ShapeDtypeStruct((OUT_CH, Mp), jnp.float32)),
        grid_spec=pltpu.PrefetchScalarGridSpec(
            num_scalar_prefetch=0,
            grid=(Mp // tm,),
            in_specs=[
                pl.BlockSpec((K, tm), lambda i: (0, i)),            # mean patches (lane-dense)
                pl.BlockSpec((K, tm), lambda i: (0, i)),            # variance patches
                pl.BlockSpec((3 * OUT_CH, K), lambda i: (0, 0)),    # packed folded weights
                pl.BlockSpec((OUT_CH, 1), lambda i: (0, 0)),        # folded BN bias
            ],
            out_specs=(pl.BlockSpec((OUT_CH, tm), lambda i: (0, i)),
                       pl.BlockSpec((OUT_CH, tm), lambda i: (0, i))),
        ),
        compiler_params=pltpu.CompilerParams(dimension_semantics=("parallel",)),
    )(pmT, pvT, w_pack, bias_col)

    om = om[:, :M].reshape(OUT_CH, N, Ho, Wo).transpose(1, 0, 2, 3)
    ov = ov[:, :M].reshape(OUT_CH, N, Ho, Wo).transpose(1, 0, 2, 3)
    return om, ov


# ---- pure-JAX reference (same math, via lax.conv) ------------------------------
def reference_forward(x_mean, x_var, params):
    Wt = params["weight"]
    dn = jax.lax.conv_dimension_numbers(x_mean.shape, Wt.shape, ("NCHW", "OIHW", "NCHW"))
    conv = lambda x, w: jax.lax.conv_general_dilated(
        x, w, (STRIDE, STRIDE), ((PAD, PAD), (PAD, PAD)), dimension_numbers=dn)
    a = params["alpha"].reshape(1, -1, 1, 1)
    y_mean = conv(x_mean, Wt)
    y_var = conv(x_var * (1.0 + a) + a * x_mean ** 2, Wt ** 2)
    g = params["gamma"].reshape(1, -1, 1, 1)
    b = params["beta"].reshape(1, -1, 1, 1)
    rm = params["running_mean"].reshape(1, -1, 1, 1)
    rv = params["running_var"].reshape(1, -1, 1, 1)
    scale = g / jnp.sqrt(rv + OPT["bn_eps"])
    y_mean = (y_mean - rm) * scale + b
    y_var = y_var * scale ** 2
    std = jnp.sqrt(y_var)
    div = y_mean / std
    pdf = _INV_SQRT_2PI * jnp.exp(-0.5 * div * div)
    cdf = 0.5 * (1.0 + jax.lax.erf(div * _INV_SQRT_2))
    om = y_mean * cdf + std * pdf
    ov = (y_mean ** 2 + y_var) * cdf + y_mean * std * pdf - om ** 2
    return om, jnp.maximum(ov, OPT["min_variance"])


if __name__ == "__main__":
    key = jax.random.PRNGKey(0)
    k1, k2, k3, k4, k5, k6, k7 = jax.random.split(key, 7)
    N, H, W = 2, 16, 16

    x_mean = jax.random.normal(k1, (N, IN_CH, H, W), jnp.float32)
    x_var = 0.1 * jax.nn.softplus(jax.random.normal(k2, (N, IN_CH, H, W), jnp.float32))

    params = dict(
        weight=jax.random.normal(k3, (OUT_CH, IN_CH, KSIZE, KSIZE), jnp.float32)
               * (1.0 / math.sqrt(IN_CH * KSIZE * KSIZE)),
        alpha=jnp.full((IN_CH,), OPT["mnv_init"], jnp.float32),
        gamma=1.0 + 0.1 * jax.random.normal(k4, (OUT_CH,), jnp.float32),
        beta=0.1 * jax.random.normal(k5, (OUT_CH,), jnp.float32),
        running_mean=0.1 * jax.random.normal(k6, (OUT_CH,), jnp.float32),
        running_var=1.0 + 0.1 * jnp.abs(jax.random.normal(k7, (OUT_CH,), jnp.float32)),
    )

    out_mean, out_var = conv_block_forward(x_mean, x_var, params)
    jax.block_until_ready((out_mean, out_var))

    ref_mean, ref_var = reference_forward(x_mean, x_var, params)
    assert out_mean.shape == (N, OUT_CH, H, W) and out_var.shape == (N, OUT_CH, H, W)
    np.testing.assert_allclose(np.asarray(out_mean), np.asarray(ref_mean), rtol=1e-3, atol=1e-4)
    np.testing.assert_allclose(np.asarray(out_var), np.asarray(ref_var), rtol=1e-3, atol=1e-4)

    print("KERNEL_OK")
</pallas_src>

<mosaic_0001>
module attributes {stable_mosaic.version = 11 : i64} {
  func.func @convblock_kernel(%arg0: i32, %arg1: memref<36x256xf32, #tpu.memory_space<vmem>>, %arg2: memref<36x256xf32, #tpu.memory_space<vmem>>, %arg3: memref<24x36xf32, #tpu.memory_space<vmem>>, %arg4: memref<8x1xf32, #tpu.memory_space<vmem>>, %arg5: memref<8x256xf32, #tpu.memory_space<vmem>>, %arg6: memref<8x256xf32, #tpu.memory_space<vmem>>) attributes {dimension_semantics = [#tpu.dimension_semantics<parallel>], iteration_bounds = array<i64: 2>, scalar_prefetch = 0 : i64, scratch_operands = 0 : i64, tpu.core_type = #tpu.core_type<tc>, window_params = [{transform_indices = @transform_0, window_bounds = array<i64: 36, 256>}, {transform_indices = @transform_1, window_bounds = array<i64: 36, 256>}, {pipeline_mode = #tpu.pipeline_mode<synchronous>, transform_indices = @transform_2, window_bounds = array<i64: 24, 36>}, {pipeline_mode = #tpu.pipeline_mode<synchronous>, transform_indices = @transform_3, window_bounds = array<i64: 8, 1>}, {transform_indices = @transform_4, window_bounds = array<i64: 8, 256>}, {transform_indices = @transform_5, window_bounds = array<i64: 8, 256>}]} {
    %c0 = arith.constant 0 : index
    %c0_0 = arith.constant 0 : index
    %0 = vector.load %arg1[%c0, %c0_0] : memref<36x256xf32, #tpu.memory_space<vmem>>, vector<36x256xf32>
    %c0_1 = arith.constant 0 : index
    %c0_2 = arith.constant 0 : index
    %1 = vector.load %arg2[%c0_1, %c0_2] : memref<36x256xf32, #tpu.memory_space<vmem>>, vector<36x256xf32>
    %c0_3 = arith.constant 0 : index
    %c0_4 = arith.constant 0 : index
    %2 = vector.load %arg3[%c0_3, %c0_4] : memref<24x36xf32, #tpu.memory_space<vmem>>, vector<24x36xf32>
    %c0_5 = arith.constant 0 : index
    %c0_6 = arith.constant 0 : index
    %3 = vector.load %arg4[%c0_5, %c0_6] : memref<8x1xf32, #tpu.memory_space<vmem>>, vector<8x1xf32>
    %4 = vector.extract_strided_slice %2 {offsets = [0, 0], sizes = [8, 36], strides = [1, 1]} : vector<24x36xf32> to vector<8x36xf32>
    %5 = vector.extract_strided_slice %2 {offsets = [8, 0], sizes = [8, 36], strides = [1, 1]} : vector<24x36xf32> to vector<8x36xf32>
    %6 = vector.extract_strided_slice %2 {offsets = [16, 0], sizes = [8, 36], strides = [1, 1]} : vector<24x36xf32> to vector<8x36xf32>
    %cst = arith.constant dense<0.000000e+00> : vector<8x256xf32>
    %7 = tpu.matmul %4, %0, %cst {dimension_numbers = #tpu.dot_dimension_numbers<[1], [0], [0], [1], [0, 0, 1, 1], [], []>} : vector<8x36xf32>, vector<36x256xf32>, vector<8x256xf32> -> vector<8x256xf32>
    %8 = vector.broadcast %3 : vector<8x1xf32> to vector<8x256xf32>
    %9 = arith.addf %7, %8 : vector<8x256xf32>
    %cst_7 = arith.constant dense<0.000000e+00> : vector<8x256xf32>
    %10 = tpu.matmul %5, %1, %cst_7 {dimension_numbers = #tpu.dot_dimension_numbers<[1], [0], [0], [1], [0, 0, 1, 1], [], []>} : vector<8x36xf32>, vector<36x256xf32>, vector<8x256xf32> -> vector<8x256xf32>
    %11 = arith.mulf %0, %0 : vector<36x256xf32>
    %cst_8 = arith.constant dense<0.000000e+00> : vector<8x256xf32>
    %12 = tpu.matmul %6, %11, %cst_8 {dimension_numbers = #tpu.dot_dimension_numbers<[1], [0], [0], [1], [0, 0, 1, 1], [], []>} : vector<8x36xf32>, vector<36x256xf32>, vector<8x256xf32> -> vector<8x256xf32>
    %13 = arith.addf %10, %12 : vector<8x256xf32>
    %14 = math.rsqrt %13 : vector<8x256xf32>
    %15 = arith.mulf %13, %14 : vector<8x256xf32>
    %16 = arith.mulf %9, %14 : vector<8x256xf32>
    %cst_9 = arith.constant -5.000000e-01 : f32
    %17 = vector.broadcast %cst_9 : f32 to vector<8x256xf32>
    %18 = arith.mulf %17, %16 : vector<8x256xf32>
    %19 = arith.mulf %18, %16 : vector<8x256xf32>
    %20 = math.exp %19 : vector<8x256xf32>
    %cst_10 = arith.constant 0.398942292 : f32
    %21 = vector.broadcast %cst_10 : f32 to vector<8x256xf32>
    %22 = arith.mulf %21, %20 : vector<8x256xf32>
    %cst_11 = arith.constant 0.707106769 : f32
    %23 = vector.broadcast %cst_11 : f32 to vector<8x256xf32>
    %24 = arith.mulf %16, %23 : vector<8x256xf32>
    %25 = math.erf %24 : vector<8x256xf32>
    %cst_12 = arith.constant 1.000000e+00 : f32
    %26 = vector.broadcast %cst_12 : f32 to vector<8x256xf32>
    %27 = arith.addf %26, %25 : vector<8x256xf32>
    %cst_13 = arith.constant 5.000000e-01 : f32
    %28 = vector.broadcast %cst_13 : f32 to vector<8x256xf32>
    %29 = arith.mulf %28, %27 : vector<8x256xf32>
    %30 = arith.mulf %9, %29 : vector<8x256xf32>
    %31 = arith.mulf %15, %22 : vector<8x256xf32>
    %32 = arith.addf %30, %31 : vector<8x256xf32>
    %33 = arith.mulf %9, %9 : vector<8x256xf32>
    %34 = arith.addf %33, %13 : vector<8x256xf32>
    %35 = arith.mulf %34, %29 : vector<8x256xf32>
    %36 = arith.mulf %9, %15 : vector<8x256xf32>
    %37 = arith.mulf %36, %22 : vector<8x256xf32>
    %38 = arith.addf %35, %37 : vector<8x256xf32>
    %39 = arith.mulf %32, %32 : vector<8x256xf32>
    %40 = arith.subf %38, %39 : vector<8x256xf32>
    %c0_14 = arith.constant 0 : index
    %c0_15 = arith.constant 0 : index
    %41 = vector.load %arg5[%c0_14, %c0_15] : memref<8x256xf32, #tpu.memory_space<vmem>>, vector<8x256xf32>
    tpu.vector_store %arg5[%c0_14, %c0_15], %32 {strides = array<i32>} : memref<8x256xf32, #tpu.memory_space<vmem>>, vector<8x256xf32>,
    %cst_16 = arith.constant 1.000000e-03 : f32
    %42 = vector.broadcast %cst_16 : f32 to vector<8x256xf32>
    %43 = arith.maximumf %40, %42 : vector<8x256xf32>
    %c0_17 = arith.constant 0 : index
    %c0_18 = arith.constant 0 : index
    %44 = vector.load %arg6[%c0_17, %c0_18] : memref<8x256xf32, #tpu.memory_space<vmem>>, vector<8x256xf32>
    tpu.vector_store %arg6[%c0_17, %c0_18], %43 {strides = array<i32>} : memref<8x256xf32, #tpu.memory_space<vmem>>, vector<8x256xf32>,
    return
  }
  func.func @transform_0(%arg0: i32) -> (i32, i32) {
    %c0_i32 = arith.constant 0 : i32
    %c0_i32_0 = arith.constant 0 : i32
    return %c0_i32, %arg0 : i32, i32
  }
  func.func @transform_1(%arg0: i32) -> (i32, i32) {
    %c0_i32 = arith.constant 0 : i32
    %c0_i32_0 = arith.constant 0 : i32
    return %c0_i32, %arg0 : i32, i32
  }
  func.func @transform_2(%arg0: i32) -> (i32, i32) {
    %c0_i32 = arith.constant 0 : i32
    %c0_i32_0 = arith.constant 0 : i32
    %c0_i32_1 = arith.constant 0 : i32
    return %c0_i32, %c0_i32_0 : i32, i32
  }
  func.func @transform_3(%arg0: i32) -> (i32, i32) {
    %c0_i32 = arith.constant 0 : i32
    %c0_i32_0 = arith.constant 0 : i32
    %c0_i32_1 = arith.constant 0 : i32
    return %c0_i32, %c0_i32_0 : i32, i32
  }
  func.func @transform_4(%arg0: i32) -> (i32, i32) {
    %c0_i32 = arith.constant 0 : i32
    %c0_i32_0 = arith.constant 0 : i32
    return %c0_i32, %arg0 : i32, i32
  }
  func.func @transform_5(%arg0: i32) -> (i32, i32) {
    %c0_i32 = arith.constant 0 : i32
    %c0_i32_0 = arith.constant 0 : i32
    return %c0_i32, %arg0 : i32, i32
  }
}

</mosaic_0001>

<llo_original>
// kernel: tpu_custom_call.1
$region0: #{tpu_custom_call.1}
  #allocation0 [shape = 'u32[]', space=smem, size = 0x4, offset = 0x4, fixed_abs, tag = 'smem constant byte address 0x4 - core index']
  #allocation1 [shape = 'u32[72,128]{1,0:T(1,128)}', space=vmem, size = 0x9000, scoped, tag = 'internal scratch']
  %s0 = inlined_call_operand.hbm [shape: f32[36,512], index: 0, kind: input, shape index: {}]
  %s1 = inlined_call_operand.hbm [shape: f32[36,512], index: 1, kind: input, shape index: {}]
  %s2 = inlined_call_operand.hbm [shape: f32[24,36], index: 2, kind: input, shape index: {}]
  %s3 = inlined_call_operand.vmem [shape: f32[8,1], index: 3, kind: input, shape index: {}]
  %s4 = inlined_call_operand.hbm [shape: f32[8,512], index: 4, kind: output, shape index: {0}]
  %s5 = inlined_call_operand.hbm [shape: f32[8,512], index: 5, kind: output, shape index: {1}]
  %6 = xla_tuple %s4, %s5
  %s7 = sld [smem:[#allocation0]]
  $region69: #{tpu_custom_call.1} parent=0
    _
  %s9 = ssub.s32 1, %s7
  %s10 = scalar_select 0, %s9, %s7
  $region1: #{tpu_custom_call.1} parent=0
    #allocation2 [shape = 'u8[81920]{0}', space=vmem, size = 0x14000, scoped, tag = 'input window, operand 0']
    #allocation3 [shape = 's32[2]{0}', space=sflag, size = 0x8, scoped, tag = 'scoped memory for tpu_custom_call.1']
    #allocation4 [shape = 's32[2]{0}', space=sflag, size = 0x8, scoped, tag = 'scoped memory for tpu_custom_call.1']
    #allocation5 [shape = 'u8[81920]{0}', space=vmem, size = 0x14000, scoped, tag = 'input window, operand 1']
    #allocation6 [shape = 's32[2]{0}', space=sflag, size = 0x8, scoped, tag = 'scoped memory for tpu_custom_call.1']
    #allocation7 [shape = 'u8[12288]{0}', space=vmem, size = 0x3000, scoped, tag = 'input window, operand 2, single buffered']
    #allocation8 [shape = 'u8[16384]{0}', space=vmem, size = 0x4000, scoped, tag = 'output window, operand 0']
    #allocation9 [shape = 'u8[16384]{0}', space=vmem, size = 0x4000, scoped, tag = 'output window, operand 1']
    #allocation10 [shape = 's32[2]{0}', space=sflag, size = 0x8, scoped, tag = 'scoped memory for tpu_custom_call.1']
    %11 = vsyncpa [#allocation3], 0
    %s12 = scalar_lea.sflag [#allocation3], 1
    %13 = vsyncpa %s12, 0
    %14 = vsyncpa [#allocation6], 0
    %s15 = scalar_lea.sflag [#allocation6], 1
    %16 = vsyncpa %s15, 0
    %17 = vsyncpa [#allocation4], 0
    %s18 = scalar_lea.sflag [#allocation4], 1
    %19 = vsyncpa %s18, 0
    %20 = vsyncpa [#allocation10], 0
    %s21 = scalar_lea.sflag [#allocation10], 1
    %22 = vsyncpa %s21, 0
    loop: start=0, step=1, limit=4
    $region2: #{tpu_custom_call.1} parent=1 // loop_pre_header
      _
    $region3: #{tpu_custom_call.1} parent=1 // loop_header
      %s24 = sphi 0, %s28
      %p25 = scmp.ge.s32.totalorder %s24, 4
      %s34 = sphi 0, %s36
      %s37 = sphi 0, %s34
      %s38 = sphi 0, %s37
      %s54 = sphi 0, %s38
      %s60 = sphi 0, %s62
      %s63 = sphi 0, %s60
      %s64 = sphi 0, %s63
      %s80 = sphi 0, %s64
      %s84 = sphi 0, %s84
      %s86 = sphi 0, %s84
      %s87 = sphi 0, %s86
      %s101 = sphi 0, %s87
      %s105 = sphi 0, %s105
      %s107 = sphi 0, %s105
      %s108 = sphi 0, %s107
      %s122 = sphi 0, %s108
      %s128 = sphi 0, %s130
      %s131 = sphi 0, %s128
      %s132 = sphi 0, %s131
      %s148 = sphi 0, %s132
      %s154 = sphi 0, %s156
      %s157 = sphi 0, %s154
      %s158 = sphi 0, %s157
      %s174 = sphi 0, %s158
    $region4: #{tpu_custom_call.1} parent=1 // loop_header_branch
      %27 = sbr.rel (%p25) target = $region8
    $region5: #{tpu_custom_call.1} parent=1 // loop_body
      %s29 = ssub.s32 %s24, 1
      %s30 = ssub.s32 %s24, 2
      %s31 = sadd.s32 %s24, 1
      %s32 = ssub.s32 %s24, %s31
      %p33 = scmp.eq.s32.totalorder %s32, 0
      %s35 = sadd.s32 %s34, 1
      %s36 = scalar_select %p33, %s34, %s35
      %p39 = pneg %p33
      %p40 = scmp.eq.s32.totalorder %s24, 1
      %p41 = por %p39, %p40
      %p42 = scmp.ne.s32.totalorder %s34, %s37
      %p43 = scmp.eq.s32.totalorder %s24, 0
      %p44 = por %p42, %p43
      %p45 = scmp.ne.s32.totalorder %s34, %s37
      %p46 = scmp.eq.s32.totalorder %s29, 1
      %p47 = por %p45, %p46
      %p48 = scmp.ne.s32.totalorder %s37, %s38
      %p49 = scmp.eq.s32.totalorder %s29, 0
      %p50 = por %p48, %p49
      %p51 = scmp.ne.s32.totalorder %s37, %s38
      %p52 = scmp.eq.s32.totalorder %s30, 1
      %p53 = por %p51, %p52
      %p55 = scmp.ne.s32.totalorder %s38, %s54
      %p56 = scmp.eq.s32.totalorder %s30, 0
      %p57 = por %p55, %p56
      %s58 = ssub.s32 %s24, %s31
      %p59 = scmp.eq.s32.totalorder %s58, 0
      %s61 = sadd.s32 %s60, 1
      %s62 = scalar_select %p59, %s60, %s61
      %p65 = pneg %p59
      %p66 = scmp.eq.s32.totalorder %s24, 1
      %p67 = por %p65, %p66
      %p68 = scmp.ne.s32.totalorder %s60, %s63
      %p69 = scmp.eq.s32.totalorder %s24, 0
      %p70 = por %p68, %p69
      %p71 = scmp.ne.s32.totalorder %s60, %s63
      %p72 = scmp.eq.s32.totalorder %s29, 1
      %p73 = por %p71, %p72
      %p74 = scmp.ne.s32.totalorder %s63, %s64
      %p75 = scmp.eq.s32.totalorder %s29, 0
      %p76 = por %p74, %p75
      %p77 = scmp.ne.s32.totalorder %s63, %s64
      %p78 = scmp.eq.s32.totalorder %s30, 1
      %p79 = por %p77, %p78
      %p81 = scmp.ne.s32.totalorder %s64, %s80
      %p82 = scmp.eq.s32.totalorder %s30, 0
      %p83 = por %p81, %p82
      %s85 = sadd.s32 %s84, 1
      %p88 = scmp.eq.s32.totalorder %s24, 1
      %p89 = scmp.ne.s32.totalorder %s84, %s86
      %p90 = scmp.eq.s32.totalorder %s24, 0
      %p91 = por %p89, %p90
      %p92 = scmp.ne.s32.totalorder %s84, %s86
      %p93 = scmp.eq.s32.totalorder %s29, 1
      %p94 = por %p92, %p93
      %p95 = scmp.ne.s32.totalorder %s86, %s87
      %p96 = scmp.eq.s32.totalorder %s29, 0
      %p97 = por %p95, %p96
      %p98 = scmp.ne.s32.totalorder %s86, %s87
      %p99 = scmp.eq.s32.totalorder %s30, 1
      %p100 = por %p98, %p99
      %p102 = scmp.ne.s32.totalorder %s87, %s101
      %p103 = scmp.eq.s32.totalorder %s30, 0
      %p104 = por %p102, %p103
      %s106 = sadd.s32 %s105, 1
      %p109 = scmp.eq.s32.totalorder %s24, 1
      %p110 = scmp.ne.s32.totalorder %s105, %s107
      %p111 = scmp.eq.s32.totalorder %s24, 0
      %p112 = por %p110, %p111
      %p113 = scmp.ne.s32.totalorder %s105, %s107
      %p114 = scmp.eq.s32.totalorder %s29, 1
      %p115 = por %p113, %p114
      %p116 = scmp.ne.s32.totalorder %s107, %s108
      %p117 = scmp.eq.s32.totalorder %s29, 0
      %p118 = por %p116, %p117
      %p119 = scmp.ne.s32.totalorder %s107, %s108
      %p120 = scmp.eq.s32.totalorder %s30, 1
      %p121 = por %p119, %p120
      %p123 = scmp.ne.s32.totalorder %s108, %s122
      %p124 = scmp.eq.s32.totalorder %s30, 0
      %p125 = por %p123, %p124
      %s126 = ssub.s32 %s24, %s31
      %p127 = scmp.eq.s32.totalorder %s126, 0
      %s129 = sadd.s32 %s128, 1
      %s130 = scalar_select %p127, %s128, %s129
      %p133 = pneg %p127
      %p134 = scmp.eq.s32.totalorder %s24, 1
      %p135 = por %p133, %p134
      %p136 = scmp.ne.s32.totalorder %s128, %s131
      %p137 = scmp.eq.s32.totalorder %s24, 0
      %p138 = por %p136, %p137
      %p139 = scmp.ne.s32.totalorder %s128, %s131
      %p140 = scmp.eq.s32.totalorder %s29, 1
      %p141 = por %p139, %p140
      %p142 = scmp.ne.s32.totalorder %s131, %s132
      %p143 = scmp.eq.s32.totalorder %s29, 0
      %p144 = por %p142, %p143
      %p145 = scmp.ne.s32.totalorder %s131, %s132
      %p146 = scmp.eq.s32.totalorder %s30, 1
      %p147 = por %p145, %p146
      %p149 = scmp.ne.s32.totalorder %s132, %s148
      %p150 = scmp.eq.s32.totalorder %s30, 0
      %p151 = por %p149, %p150
      %s152 = ssub.s32 %s24, %s31
      %p153 = scmp.eq.s32.totalorder %s152, 0
      %s155 = sadd.s32 %s154, 1
      %s156 = scalar_select %p153, %s154, %s155
      %p159 = pneg %p153
      %p160 = scmp.eq.s32.totalorder %s24, 1
      %p161 = por %p159, %p160
      %p162 = scmp.ne.s32.totalorder %s154, %s157
      %p163 = scmp.eq.s32.totalorder %s24, 0
      %p164 = por %p162, %p163
      %p165 = scmp.ne.s32.totalorder %s154, %s157
      %p166 = scmp.eq.s32.totalorder %s29, 1
      %p167 = por %p165, %p166
      %p168 = scmp.ne.s32.totalorder %s157, %s158
      %p169 = scmp.eq.s32.totalorder %s29, 0
      %p170 = por %p168, %p169
      %p171 = scmp.ne.s32.totalorder %s157, %s158
      %p172 = scmp.eq.s32.totalorder %s30, 1
      %p173 = por %p171, %p172
      %p175 = scmp.ne.s32.totalorder %s158, %s174
      %p176 = scmp.eq.s32.totalorder %s30, 0
      %p177 = por %p175, %p176
      %p178 = scmp.le.s32.totalorder 1, %s24
      %p179 = scmp.lt.s32.totalorder %s24, 3
      %p180 = pnand %p178, %p179
      %p181 = pneg %p180
      // Predicated region
      $region9: #{tpu_custom_call.1} parent=5 // pred_check
        _
      $region10: #{tpu_custom_call.1} parent=5 // pred_check_branch
        %183 = sbr.rel (%p180) target = $region12
      $region11: #{tpu_custom_call.1} parent=5 // pred_region
        %s184 = ssub.s32 %s24, 1
        // Predicated region
        $region13: #{tpu_custom_call.1} parent=11 // pred_check
          %p185 = pneg %p97
        $region14: #{tpu_custom_call.1} parent=11 // pred_check_branch
          %187 = sbr.rel (%p185) target = $region16
        $region15: #{tpu_custom_call.1} parent=11 // pred_region
          %189 = vsyncadd [#allocation6], 0
          %s190 = sshll.u32 %s2, 4
          %s191 = int_to_ptr.hbm [resolvable:$true] %s190
          %s192 = sshll.u32 [#allocation7], 4
          %s193 = int_to_ptr.vmem [resolvable:$true] %s192
          %198 = dma.hbm_to_vmem [thread:$0]  %s191, 384, %s193, [#allocation6], 128, 128, 8
        $region16: #{tpu_custom_call.1} parent=11 // pred_fallthru
          _
        // Predicated region
        $region17: #{tpu_custom_call.1} parent=11 // pred_check
          %p199 = pneg %p118
        $region18: #{tpu_custom_call.1} parent=11 // pred_check_branch
          %201 = sbr.rel (%p199) target = $region20
        $region19: #{tpu_custom_call.1} parent=11 // pred_region
          _
        $region20: #{tpu_custom_call.1} parent=11 // pred_fallthru
          _
      $region12: #{tpu_custom_call.1} parent=5 // pred_fallthru
        _
      %p202 = scmp.lt.s32.totalorder %s24, 2
      // Predicated region
      $region21: #{tpu_custom_call.1} parent=5 // pred_check
        %p203 = pneg %p202
      $region22: #{tpu_custom_call.1} parent=5 // pred_check_branch
        %205 = sbr.rel (%p203) target = $region24
      $region23: #{tpu_custom_call.1} parent=5 // pred_region
        // Predicated region
        $region25: #{tpu_custom_call.1} parent=23 // pred_check
          %p206 = pneg %p44
        $region26: #{tpu_custom_call.1} parent=23 // pred_check_branch
          %208 = sbr.rel (%p206) target = $region28
        $region27: #{tpu_custom_call.1} parent=23 // pred_region
          %s209 = sand.u32 %s34, 1
          %s210 = scalar_lea.sflag [#allocation3], %s209
          %s211 = sand.u32 %s34, 1
          %s212 = smul.addr %s211, 80
          %s213 = scalar_lea.vmem [#allocation2], %s212
          %s214 = smul.u32 2, %s24
          %216 = vsyncadd %s210, 0
          %s217 = smul.addr %s214, 8
          %s218 = scalar_lea.hbm %s0, %s217
          %s219 = sshll.u32 %s218, 4
          %s220 = int_to_ptr.hbm [resolvable:$true] %s219
          %s221 = sshll.u32 %s213, 4
          %s222 = int_to_ptr.vmem [resolvable:$true] %s221
          %227 = dma.hbm_to_vmem [thread:$0]  %s220, 1280, %s222, %s210, 512, 256, 16
        $region28: #{tpu_custom_call.1} parent=23 // pred_fallthru
          _
        // Predicated region
        $region29: #{tpu_custom_call.1} parent=23 // pred_check
          %p228 = pneg %p70
        $region30: #{tpu_custom_call.1} parent=23 // pred_check_branch
          %230 = sbr.rel (%p228) target = $region32
        $region31: #{tpu_custom_call.1} parent=23 // pred_region
          %s231 = sand.u32 %s24, 1
          %s232 = scalar_lea.sflag [#allocation6], %s231
          %s233 = sand.u32 %s60, 1
          %s234 = smul.addr %s233, 80
          %s235 = scalar_lea.vmem [#allocation5], %s234
          %s236 = smul.u32 2, %s24
          %238 = vsyncadd %s232, 0
          %s239 = smul.addr %s236, 8
          %s240 = scalar_lea.hbm %s1, %s239
          %s241 = sshll.u32 %s240, 4
          %s242 = int_to_ptr.hbm [resolvable:$true] %s241
          %s243 = sshll.u32 %s235, 4
          %s244 = int_to_ptr.vmem [resolvable:$true] %s243
          %249 = dma.hbm_to_vmem [thread:$0]  %s242, 1280, %s244, %s232, 512, 256, 16
        $region32: #{tpu_custom_call.1} parent=23 // pred_fallthru
          _
      $region24: #{tpu_custom_call.1} parent=5 // pred_fallthru
        _
      %p250 = scmp.le.s32.totalorder 1, %s24
      %p251 = scmp.lt.s32.totalorder %s24, 3
      %p252 = pnand %p250, %p251
      %p253 = pneg %p252
      // Predicated region
      $region33: #{tpu_custom_call.1} parent=5 // pred_check
        _
      $region34: #{tpu_custom_call.1} parent=5 // pred_check_branch
        %255 = sbr.rel (%p252) target = $region36
      $region35: #{tpu_custom_call.1} parent=5 // pred_region
        %s256 = ssub.s32 %s24, 1
        %s257 = sand.u32 %s37, 1
        %s258 = scalar_lea.sflag [#allocation3], %s257
        %s259 = sand.u32 %s37, 1
        %s260 = smul.addr %s259, 80
        %s261 = scalar_lea.vmem [#allocation2], %s260
        // Predicated region
        $region37: #{tpu_custom_call.1} parent=35 // pred_check
          %p262 = pneg %p50
        $region38: #{tpu_custom_call.1} parent=35 // pred_check_branch
          %264 = sbr.rel (%p262) target = $region40
        $region39: #{tpu_custom_call.1} parent=35 // pred_region
          %266 = dma.done %s258, 1280
        $region40: #{tpu_custom_call.1} parent=35 // pred_fallthru
          _
        %s267 = sand.u32 %s29, 1
        %s268 = scalar_lea.sflag [#allocation6], %s267
        %s269 = sand.u32 %s63, 1
        %s270 = smul.addr %s269, 80
        %s271 = scalar_lea.vmem [#allocation5], %s270
        // Predicated region
        $region41: #{tpu_custom_call.1} parent=35 // pred_check
          %p272 = pneg %p76
        $region42: #{tpu_custom_call.1} parent=35 // pred_check_branch
          %274 = sbr.rel (%p272) target = $region44
        $region43: #{tpu_custom_call.1} parent=35 // pred_region
          %276 = dma.done %s268, 1280
        $region44: #{tpu_custom_call.1} parent=35 // pred_fallthru
          _
        // Predicated region
        $region45: #{tpu_custom_call.1} parent=35 // pred_check
          %p277 = pneg %p97
        $region46: #{tpu_custom_call.1} parent=35 // pred_check_branch
          %279 = sbr.rel (%p277) target = $region48
        $region47: #{tpu_custom_call.1} parent=35 // pred_region
          %281 = dma.done [#allocation6], 384
        $region48: #{tpu_custom_call.1} parent=35 // pred_fallthru
          _
        %s282 = sand.u32 %s37, 1
        %s283 = scalar_lea.sflag [#allocation3], %s282
        %s284 = sand.u32 %s37, 1
        %s285 = smul.addr %s284, 80
        %s286 = scalar_lea.vmem [#allocation2], %s285
        %p287 = pneg %p50
        %p288 = pneg %p47
        %s289 = sand.u32 %s29, 1
        %s290 = scalar_lea.sflag [#allocation6], %s289
        %s291 = sand.u32 %s63, 1
        %s292 = smul.addr %s291, 80
        %s293 = scalar_lea.vmem [#allocation5], %s292
        %p294 = pneg %p76
        %p295 = pneg %p73
        %p296 = pneg %p97
        %p297 = pneg %p94
        %p298 = pneg %p118
        %p299 = pneg %p115
        %p300 = pneg %p144
        %p301 = pneg %p141
        %s302 = sand.u32 %s131, 1
        %s303 = scalar_lea.sflag [#allocation4], %s302
        %s304 = sand.u32 %s131, 1
        %s305 = smul.addr %s304, 16
        %s306 = scalar_lea.vmem [#allocation8], %s305
        %p307 = pneg %p170
        %p308 = pneg %p167
        %s309 = sand.u32 %s157, 1
        %s310 = scalar_lea.sflag [#allocation10], %s309
        %s311 = sand.u32 %s157, 1
        %s312 = smul.addr %s311, 16
        %s313 = scalar_lea.vmem [#allocation9], %s312
        %s314 = smul.u32 2, %s29
        %s315 = smul.u32 2, %s29
        %s316 = smul.u32 2, %s29
        %s317 = smul.u32 2, %s29
        %v318 = vld [vmem:[%s261] sm:$0xff]
        %v319 = vld [vmem:[%s261 + $0x8] sm:$0xff]
        %v320 = vld [vmem:[%s261 + $0x10] sm:$0xff]
        %v321 = vld [vmem:[%s261 + $0x18] sm:$0xff]
        %v322 = vld [vmem:[%s261 + $0x20] sm:$0xff]
        %v323 = vld [vmem:[%s261 + $0x28] sm:$0xff]
        %v324 = vld [vmem:[%s261 + $0x30] sm:$0xff]
        %v325 = vld [vmem:[%s261 + $0x38] sm:$0xff]
        %v326 = vld [vmem:[%s261 + $0x40] sm:$0xf]
        %v327 = vld [vmem:[%s261 + $0x48] sm:$0xf]
        %v328 = vld [vmem:[%s271] sm:$0xff]
        %v329 = vld [vmem:[%s271 + $0x8] sm:$0xff]
        %v330 = vld [vmem:[%s271 + $0x10] sm:$0xff]
        %v331 = vld [vmem:[%s271 + $0x18] sm:$0xff]
        %v332 = vld [vmem:[%s271 + $0x20] sm:$0xff]
        %v333 = vld [vmem:[%s271 + $0x28] sm:$0xff]
        %v334 = vld [vmem:[%s271 + $0x30] sm:$0xff]
        %v335 = vld [vmem:[%s271 + $0x38] sm:$0xff]
        %v336 = vld [vmem:[%s271 + $0x40] sm:$0xf]
        %v337 = vld [vmem:[%s271 + $0x48] sm:$0xf]
        %v338 = vld [vmem:[#allocation7] sm:$0xff]
        %v339 = vld [vmem:[#allocation7 + $0x8] sm:$0xff]
        %v340 = vld [vmem:[#allocation7 + $0x10] sm:$0xff]
        %v341 = vld [vmem:[%s3] sm:$0xff]
        %343 = vset.pattern.permute.xlu0 0
        %344 = vperm.xlu0 %343, %v341
        %v345 = vpop.permute.xlu0 %344
        %vm347 = vcmask 293888
        %v349 = vsel %vm347, %v338, 0
        %vm351 = vcmask 1043456
        %v353 = vsel %vm351, %v326, 0
        %v356 = vsel %vm351, %v327, 0
        %358 = vmatpush.msra.mxu0 0.0
        %359 = vmatpush.msra.mxu0 0.0
        %360 = vmatpush.msra.mxu0 0.0
        %361 = vmatpush.msra.mxu0 0.0
        %362 = vmatpush.msra.mxu0 0.0
        %363 = vmatpush.msra.mxu0 0.0
        %364 = vmatpush.msra.mxu0 0.0
        %365 = vmatpush.msra.mxu0 0.0
        %366 = vmatpush.msra.mxu0 0.0
        %367 = vmatpush.msra.mxu0 0.0
        %368 = vmatpush.msra.mxu0 0.0
        %369 = vmatpush.msra.mxu0 %v353
        %370 = vmatpush.msra.mxu0 %v324
        %371 = vmatpush.msra.mxu0 %v322
        %372 = vmatpush.msra.mxu0 %v320
        %373 = vmatpush.msra.mxu0 %v318
        %374 = vmatmul.f32.gmra.mxu0 %v349
        %v375 = vpop.f32.mrf.mxu0
        %v376 = vadd.f32 %v345, %v375
        %377 = vdwg.mxu0
        %378 = vmatpush.msra.mxu0 0.0
        %379 = vmatpush.msra.mxu0 0.0
        %380 = vmatpush.msra.mxu0 0.0
        %381 = vmatpush.msra.mxu0 0.0
        %382 = vmatpush.msra.mxu0 0.0
        %383 = vmatpush.msra.mxu0 0.0
        %384 = vmatpush.msra.mxu0 0.0
        %385 = vmatpush.msra.mxu0 0.0
        %386 = vmatpush.msra.mxu0 0.0
        %387 = vmatpush.msra.mxu0 0.0
        %388 = vmatpush.msra.mxu0 0.0
        %389 = vmatpush.msra.mxu0 %v356
        %390 = vmatpush.msra.mxu0 %v325
        %391 = vmatpush.msra.mxu0 %v323
        %392 = vmatpush.msra.mxu0 %v321
        %393 = vmatpush.msra.mxu0 %v319
        %394 = vmatmul.f32.gmra.mxu0 %v349
        %v395 = vpop.f32.mrf.mxu0
        %v396 = vadd.f32 %v345, %v395
        %397 = vdwg.mxu0
        %v398 = vmul.f32 %v318, %v318
        %v399 = vmul.f32 %v319, %v319
        %v400 = vmul.f32 %v320, %v320
        %v401 = vmul.f32 %v321, %v321
        %v402 = vmul.f32 %v322, %v322
        %v403 = vmul.f32 %v323, %v323
        %v404 = vmul.f32 %v324, %v324
        %v405 = vmul.f32 %v325, %v325
        %v406 = vmul.f32 %v326, %v326
        %v407 = vmul.f32 %v327, %v327
        %v409 = vsel %vm347, %v340, 0
        %v412 = vsel %vm351, %v406, 0
        %v415 = vsel %vm351, %v407, 0
        %417 = vmatpush.msra.mxu0 0.0
        %418 = vmatpush.msra.mxu0 0.0
        %419 = vmatpush.msra.mxu0 0.0
        %420 = vmatpush.msra.mxu0 0.0
        %421 = vmatpush.msra.mxu0 0.0
        %422 = vmatpush.msra.mxu0 0.0
        %423 = vmatpush.msra.mxu0 0.0
        %424 = vmatpush.msra.mxu0 0.0
        %425 = vmatpush.msra.mxu0 0.0
        %426 = vmatpush.msra.mxu0 0.0
        %427 = vmatpush.msra.mxu0 0.0
        %428 = vmatpush.msra.mxu0 %v412
        %429 = vmatpush.msra.mxu0 %v404
        %430 = vmatpush.msra.mxu0 %v402
        %431 = vmatpush.msra.mxu0 %v400
        %432 = vmatpush.msra.mxu0 %v398
        %433 = vmatmul.f32.gmra.mxu0 %v409
        %v434 = vpop.f32.mrf.mxu0
        %v435 = vadd.f32 0.0, %v434
        %436 = vdwg.mxu0
        %437 = vmatpush.msra.mxu0 0.0
        %438 = vmatpush.msra.mxu0 0.0
        %439 = vmatpush.msra.mxu0 0.0
        %440 = vmatpush.msra.mxu0 0.0
        %441 = vmatpush.msra.mxu0 0.0
        %442 = vmatpush.msra.mxu0 0.0
        %443 = vmatpush.msra.mxu0 0.0
        %444 = vmatpush.msra.mxu0 0.0
        %445 = vmatpush.msra.mxu0 0.0
        %446 = vmatpush.msra.mxu0 0.0
        %447 = vmatpush.msra.mxu0 0.0
        %448 = vmatpush.msra.mxu0 %v415
        %449 = vmatpush.msra.mxu0 %v405
        %450 = vmatpush.msra.mxu0 %v403
        %451 = vmatpush.msra.mxu0 %v401
        %452 = vmatpush.msra.mxu0 %v399
        %453 = vmatmul.f32.gmra.mxu0 %v409
        %v454 = vpop.f32.mrf.mxu0
        %v455 = vadd.f32 0.0, %v454
        %456 = vdwg.mxu0
        %v458 = vsel %vm347, %v339, 0
        %v461 = vsel %vm351, %v336, 0
        %v464 = vsel %vm351, %v337, 0
        %466 = vmatpush.msra.mxu0 0.0
        %467 = vmatpush.msra.mxu0 0.0
        %468 = vmatpush.msra.mxu0 0.0
        %469 = vmatpush.msra.mxu0 0.0
        %470 = vmatpush.msra.mxu0 0.0
        %471 = vmatpush.msra.mxu0 0.0
        %472 = vmatpush.msra.mxu0 0.0
        %473 = vmatpush.msra.mxu0 0.0
        %474 = vmatpush.msra.mxu0 0.0
        %475 = vmatpush.msra.mxu0 0.0
        %476 = vmatpush.msra.mxu0 0.0
        %477 = vmatpush.msra.mxu0 %v461
        %478 = vmatpush.msra.mxu0 %v334
        %479 = vmatpush.msra.mxu0 %v332
        %480 = vmatpush.msra.mxu0 %v330
        %481 = vmatpush.msra.mxu0 %v328
        %482 = vmatmul.f32.gmra.mxu0 %v458
        %v483 = vpop.f32.mrf.mxu0
        %v484 = vadd.f32 %v435, %v483
        %485 = vdwg.mxu0
        %486 = vmatpush.msra.mxu0 0.0
        %487 = vmatpush.msra.mxu0 0.0
        %488 = vmatpush.msra.mxu0 0.0
        %489 = vmatpush.msra.mxu0 0.0
        %490 = vmatpush.msra.mxu0 0.0
        %491 = vmatpush.msra.mxu0 0.0
        %492 = vmatpush.msra.mxu0 0.0
        %493 = vmatpush.msra.mxu0 0.0
        %494 = vmatpush.msra.mxu0 0.0
        %495 = vmatpush.msra.mxu0 0.0
        %496 = vmatpush.msra.mxu0 0.0
        %497 = vmatpush.msra.mxu0 %v464
        %498 = vmatpush.msra.mxu0 %v335
        %499 = vmatpush.msra.mxu0 %v333
        %500 = vmatpush.msra.mxu0 %v331
        %501 = vmatpush.msra.mxu0 %v329
        %502 = vmatmul.f32.gmra.mxu0 %v458
        %v503 = vpop.f32.mrf.mxu0
        %v504 = vadd.f32 %v455, %v503
        %505 = vdwg.mxu0
        %v506 = vrsqrt.pop %v484
        %v507 = vmul.f32 %v506, %v484
        %v508 = vmul.f32 %v507, %v506
        %v509 = vmul.f32 0.5, %v508
        %v510 = vsub.f32 1.5, %v509
        %v511 = vmul.f32 %v506, %v510
        %vm512 = vweird.f32 %v484
        %vm513 = vweird.f32 %v506
        %vm514 = vmor %vm512, %vm513
        %v515 = vsel %vm514, %v506, %v511
        %v516 = vrsqrt.pop %v504
        %v517 = vmul.f32 %v516, %v504
        %v518 = vmul.f32 %v517, %v516
        %v519 = vmul.f32 0.5, %v518
        %v520 = vsub.f32 1.5, %v519
        %v521 = vmul.f32 %v516, %v520
        %vm522 = vweird.f32 %v504
        %vm523 = vweird.f32 %v516
        %vm524 = vmor %vm522, %vm523
        %v525 = vsel %vm524, %v516, %v521
        %v526 = vmul.f32 %v484, %v515
        %v527 = vmul.f32 %v504, %v525
        %v528 = vmul.f32 %v376, %v515
        %v529 = vmul.f32 %v396, %v525
        %v530 = vmul.f32 %v528, -0.5
        %v531 = vmul.f32 %v529, -0.5
        %v532 = vmul.f32 %v530, %v528
        %v533 = vmul.f32 %v531, %v529
        %v534 = vmul.f32 %v532, 1.442695
        %v535 = vpow.pop %v534
        %v536 = vmul.f32 %v533, 1.442695
        %v537 = vpow.pop %v536
        %v538 = vmul.f32 %v535, 0.3989423
        %v539 = vmul.f32 %v537, 0.3989423
        %v540 = vmul.f32 %v528, 0.70710677
        %v541 = vmul.f32 %v529, 0.70710677
        %v542 = vmul.f32 %v540, %v540
        %v543 = vmin.f32 16.0, %v542
        %v544 = vmul.f32 %v543, 2.1237322e-06
        %v545 = vadd.f32 %v544, 0.00028619796
        %v546 = vmul.f32 %v543, %v545
        %v547 = vadd.f32 %v546, 0.0036580483
        %v548 = vmul.f32 %v543, %v547
        %v549 = vadd.f32 %v548, 0.05243302
        %v550 = vmul.f32 %v543, %v549
        %v551 = vadd.f32 %v550, 0.18741608
        %v552 = vmul.f32 %v543, %v551
        %v553 = vadd.f32 %v552, 1.1283791
        %v554 = vmul.f32 %v540, %v553
        %v555 = vmul.f32 %v543, 3.8918573e-05
        %v556 = vadd.f32 %v555, 0.001143296
        %v557 = vmul.f32 %v543, %v556
        %v558 = vadd.f32 %v557, 0.014752088
        %v559 = vmul.f32 %v543, %v558
        %v560 = vadd.f32 %v559, 0.112945676
        %v561 = vmul.f32 %v543, %v560
        %v562 = vadd.f32 %v561, 0.4994258
        %v563 = vmul.f32 %v543, %v562
        %v564 = vadd.f32 %v563, 1.0
        %v565 = vrcp.pop %v564
        %v566 = vmul.f32 %v564, %v565
        %v567 = vsub.f32 1.0, %v566
        %v568 = vmul.f32 %v565, %v567
        %v569 = vadd.f32 %v565, %v568
        %vm570 = vweird.f32 %v564
        %vm571 = vweird.f32 %v565
        %vm572 = vmor %vm570, %vm571
        %v573 = vsel %vm572, %v565, %v569
        %v574 = vand.u32 2147483647, %v564
        %vm575 = vcmp.eq.f32.partialorder %v574, 8.507059e+37
        %v576 = vand.u32 %v564, 2147483648
        %v577 = vor.u32 1.1754944e-38, %v576
        %v578 = vsel %vm575, %v577, %v573
        %v579 = vmul.f32 %v554, %v578
        %v580 = vmin.f32 %v579, 1.0
        %v581 = vmax.f32 %v580, -1.0
        %v582 = vmul.f32 %v541, %v541
        %v583 = vmin.f32 16.0, %v582
        %v584 = vmul.f32 %v583, 2.1237322e-06
        %v585 = vadd.f32 %v584, 0.00028619796
        %v586 = vmul.f32 %v583, %v585
        %v587 = vadd.f32 %v586, 0.0036580483
        %v588 = vmul.f32 %v583, %v587
        %v589 = vadd.f32 %v588, 0.05243302
        %v590 = vmul.f32 %v583, %v589
        %v591 = vadd.f32 %v590, 0.18741608
        %v592 = vmul.f32 %v583, %v591
        %v593 = vadd.f32 %v592, 1.1283791
        %v594 = vmul.f32 %v541, %v593
        %v595 = vmul.f32 %v583, 3.8918573e-05
        %v596 = vadd.f32 %v595, 0.001143296
        %v597 = vmul.f32 %v583, %v596
        %v598 = vadd.f32 %v597, 0.014752088
        %v599 = vmul.f32 %v583, %v598
        %v600 = vadd.f32 %v599, 0.112945676
        %v601 = vmul.f32 %v583, %v600
        %v602 = vadd.f32 %v601, 0.4994258
        %v603 = vmul.f32 %v583, %v602
        %v604 = vadd.f32 %v603, 1.0
        %v605 = vrcp.pop %v604
        %v606 = vmul.f32 %v604, %v605
        %v607 = vsub.f32 1.0, %v606
        %v608 = vmul.f32 %v605, %v607
        %v609 = vadd.f32 %v605, %v608
        %vm610 = vweird.f32 %v604
        %vm611 = vweird.f32 %v605
        %vm612 = vmor %vm610, %vm611
        %v613 = vsel %vm612, %v605, %v609
        %v614 = vand.u32 2147483647, %v604
        %vm615 = vcmp.eq.f32.partialorder %v614, 8.507059e+37
        %v616 = vand.u32 %v604, 2147483648
        %v617 = vor.u32 1.1754944e-38, %v616
        %v618 = vsel %vm615, %v617, %v613
        %v619 = vmul.f32 %v594, %v618
        %v620 = vmin.f32 %v619, 1.0
        %v621 = vmax.f32 %v620, -1.0
        %v622 = vadd.f32 %v581, 1.0
        %v623 = vadd.f32 %v621, 1.0
        %v624 = vmul.f32 %v622, 0.5
        %v625 = vmul.f32 %v623, 0.5
        %v626 = vmul.f32 %v376, %v624
        %v627 = vmul.f32 %v396, %v625
        %v628 = vmul.f32 %v526, %v538
        %v629 = vmul.f32 %v527, %v539
        %v630 = vadd.f32 %v626, %v628
        %v631 = vadd.f32 %v627, %v629
        %v632 = vmul.f32 %v376, %v376
        %v633 = vmul.f32 %v396, %v396
        %v634 = vadd.f32 %v632, %v484
        %v635 = vadd.f32 %v633, %v504
        %v636 = vmul.f32 %v634, %v624
        %v637 = vmul.f32 %v635, %v625
        %v638 = vmul.f32 %v376, %v526
        %v639 = vmul.f32 %v396, %v527
        %v640 = vmul.f32 %v638, %v538
        %v641 = vmul.f32 %v639, %v539
        %v642 = vadd.f32 %v636, %v640
        %v643 = vadd.f32 %v637, %v641
        %v644 = vmul.f32 %v630, %v630
        %v645 = vmul.f32 %v631, %v631
        %v646 = vsub.f32 %v642, %v644
        %v647 = vsub.f32 %v643, %v645
        %648 = vst [vmem:[%s306] sm:$0xff] %v630
        %649 = vst [vmem:[%s306 + $0x8] sm:$0xff] %v631
        %v650 = vmax.f32 %v646, 0.001
        %v651 = vmax.f32 %v647, 0.001
        %652 = vst [vmem:[%s313] sm:$0xff] %v650
        %653 = vst [vmem:[%s313 + $0x8] sm:$0xff] %v651
        %s654 = sand.u32 %s131, 1
        %s655 = scalar_lea.sflag [#allocation4], %s654
        %s656 = sand.u32 %s131, 1
        %s657 = smul.addr %s656, 16
        %s658 = scalar_lea.vmem [#allocation8], %s657
        %s659 = sand.u32 %s157, 1
        %s660 = scalar_lea.sflag [#allocation10], %s659
        %s661 = sand.u32 %s157, 1
        %s662 = smul.addr %s661, 16
        %s663 = scalar_lea.vmem [#allocation9], %s662
        // Predicated region
        $region49: #{tpu_custom_call.1} parent=35 // pred_check
          %p664 = pneg %p141
        $region50: #{tpu_custom_call.1} parent=35 // pred_check_branch
          %666 = sbr.rel (%p664) target = $region52
        $region51: #{tpu_custom_call.1} parent=35 // pred_region
          %s667 = smul.u32 2, %s29
          %669 = vsyncadd %s655, 0
          %s670 = smul.addr %s667, 8
          %s671 = scalar_lea.hbm %s4, %s670
          %s673 = sshll.u32 %s658, 4
          %s674 = int_to_ptr.vmem [resolvable:$true] %s673
          %s675 = sshll.u32 %s671, 4
          %s676 = int_to_ptr.hbm [resolvable:$true] %s675
          %678 = dma.vmem_to_hbm [thread:$0]  %s674, 256, %s676, %s655
        $region52: #{tpu_custom_call.1} parent=35 // pred_fallthru
          _
        // Predicated region
        $region53: #{tpu_custom_call.1} parent=35 // pred_check
          %p679 = pneg %p167
        $region54: #{tpu_custom_call.1} parent=35 // pred_check_branch
          %681 = sbr.rel (%p679) target = $region56
        $region55: #{tpu_custom_call.1} parent=35 // pred_region
          %s682 = smul.u32 2, %s29
          %684 = vsyncadd %s660, 0
          %s685 = smul.addr %s682, 8
          %s686 = scalar_lea.hbm %s5, %s685
          %s688 = sshll.u32 %s663, 4
          %s689 = int_to_ptr.vmem [resolvable:$true] %s688
          %s690 = sshll.u32 %s686, 4
          %s691 = int_to_ptr.hbm [resolvable:$true] %s690
          %693 = dma.vmem_to_hbm [thread:$0]  %s689, 256, %s691, %s660
        $region56: #{tpu_custom_call.1} parent=35 // pred_fallthru
          _
      $region36: #{tpu_custom_call.1} parent=5 // pred_fallthru
        _
      %p694 = scmp.le.s32.totalorder 2, %s24
      // Predicated region
      $region57: #{tpu_custom_call.1} parent=5 // pred_check
        %p695 = pneg %p694
      $region58: #{tpu_custom_call.1} parent=5 // pred_check_branch
        %697 = sbr.rel (%p695) target = $region60
      $region59: #{tpu_custom_call.1} parent=5 // pred_region
        %s698 = ssub.s32 %s24, 2
        // Predicated region
        $region61: #{tpu_custom_call.1} parent=59 // pred_check
          %p699 = pneg %p147
        $region62: #{tpu_custom_call.1} parent=59 // pred_check_branch
          %701 = sbr.rel (%p699) target = $region64
        $region63: #{tpu_custom_call.1} parent=59 // pred_region
          %s702 = sand.u32 %s132, 1
          %s703 = scalar_lea.sflag [#allocation4], %s702
          %s704 = sand.u32 %s132, 1
          %s705 = smul.addr %s704, 16
          %s706 = scalar_lea.vmem [#allocation8], %s705
          %708 = dma.done %s703, 256
        $region64: #{tpu_custom_call.1} parent=59 // pred_fallthru
          _
        // Predicated region
        $region65: #{tpu_custom_call.1} parent=59 // pred_check
          %p709 = pneg %p173
        $region66: #{tpu_custom_call.1} parent=59 // pred_check_branch
          %711 = sbr.rel (%p709) target = $region68
        $region67: #{tpu_custom_call.1} parent=59 // pred_region
          %s712 = sand.u32 %s158, 1
          %s713 = scalar_lea.sflag [#allocation10], %s712
          %s714 = sand.u32 %s158, 1
          %s715 = smul.addr %s714, 16
          %s716 = scalar_lea.vmem [#allocation9], %s715
          %718 = dma.done %s713, 256
        $region68: #{tpu_custom_call.1} parent=59 // pred_fallthru
          _
      $region60: #{tpu_custom_call.1} parent=5 // pred_fallthru
        _
    $region6: #{tpu_custom_call.1} parent=1 // loop_footer
      %s28 = sadd.s32 1, %s24
    $region7: #{tpu_custom_call.1} parent=1 // loop_footer_branch
      %23 = sbr.rel target = $region3
    $region8: #{tpu_custom_call.1} parent=1 // loop_exit
      _
    %719 = vsyncpa [#allocation3], 1
    %s720 = scalar_lea.sflag [#allocation3], 1
    %721 = vsyncpa %s720, 1
    %722 = vsyncpa [#allocation6], 1
    %s723 = scalar_lea.sflag [#allocation6], 1
    %724 = vsyncpa %s723, 1
    %725 = vsyncpa [#allocation4], 1
    %s726 = scalar_lea.sflag [#allocation4], 1
    %727 = vsyncpa %s726, 1
    %728 = vsyncpa [#allocation10], 1
    %s729 = scalar_lea.sflag [#allocation10], 1
    %730 = vsyncpa %s729, 1

</llo_original>
